<compile_context>
chip_gen: v7x
topology: tpu7x:2x2x1
jax: 0.10.0
libtpu: 0.0.40
codegen_flags: <defaults>
</compile_context>

<pallas_src>
import functools
import math

import jax
import jax.numpy as jnp
from jax.experimental import pallas as pl
from jax.experimental.pallas import tpu as pltpu


def _tcn_kernel(x_ref, w_ref, scale_ref, shift_ref, o_ref, *,
                K, pad, V, stride, TPV, C_in, chunks):
    """One grid step = one batch element x one C_out tile.

    x_ref:     (1, C_in, stride*TPV)     polyphase-split, lane-dense input
    w_ref:     (C_out_t, K*C_in)         unscaled conv weights (compute dtype)
    scale_ref: (C_out_t, 1)              per-channel BN scale, f32
    shift_ref: (C_out_t, 1)              per-channel shift (conv bias + BN), f32
    o_ref:     (1, C_out_t, TV_out_pad)  lane-dense output
    """
    scale = scale_ref[...]
    shift = shift_ref[...]
    c_out_t = o_ref.shape[1]

    # Static Python loop over output lane chunks (all offsets Python-static).
    for lo_out, hi_out in chunks:
        width = hi_out - lo_out
        acc = jnp.zeros((c_out_t, width), jnp.float32)
        for k in range(K):                       # per-tap accumulated MXU dot
            q, r = divmod(k - pad, stride)       # phase r, frame shift q
            base = r * TPV
            lo = lo_out + q * V                  # source lanes within phase r
            hi = lo + width
            lo_c, hi_c = max(lo, 0), min(hi, TPV)
            if lo_c >= hi_c:
                continue                         # tap fully outside -> skip
            win = x_ref[0, :, base + lo_c:base + hi_c]
            pad_lo, pad_hi = lo_c - lo, hi - hi_c
            if pad_lo or pad_hi:                 # boundary chunks only
                parts = []
                if pad_lo:
                    parts.append(jnp.zeros((C_in, pad_lo), win.dtype))
                parts.append(win)
                if pad_hi:
                    parts.append(jnp.zeros((C_in, pad_hi), win.dtype))
                win = jnp.concatenate(parts, axis=1)
            acc = acc + jnp.dot(w_ref[:, k * C_in:(k + 1) * C_in], win,
                                preferred_element_type=jnp.float32)
        o_ref[0, :, lo_out:hi_out] = (acc * scale + shift).astype(o_ref.dtype)


def _default_c_out_tile():
    # v6e/v7x MXUs are 2x256x256 -> 256-row LHS tiles; 128 for v5e and older.
    try:
        kind = jax.devices()[0].device_kind.lower()
    except Exception:
        kind = ""
    if any(g in kind for g in ("v2", "v3", "v4", "v5")):
        return 128
    return 256


def unit_tcn_forward(x, weight, bias, bn_gamma, bn_beta, bn_mean, bn_var,
                     *, kernel_size=9, stride=1, eps=1e-5,
                     compute_dtype=jnp.bfloat16, out_dtype=None,
                     lane_chunk=1024, c_out_tile=None):
    """x: (N, C_in, T, V); weight: (C_out, C_in, K, 1) -> (N, C_out, T_out, V)."""
    if out_dtype is None:
        out_dtype = compute_dtype
    N, C_in, T, V = x.shape
    C_out = weight.shape[0]
    K = kernel_size
    pad = (K - 1) // 2
    T_out = (T + 2 * pad - K) // stride + 1
    TV_out = T_out * V
    TV_out_pad = ((TV_out + 127) // 128) * 128     # lane-dense unmasked stores
    lane_chunk = max(128, ((lane_chunk + 127) // 128) * 128)

    # Eval-mode BatchNorm folded into a per-channel f32 scale + shift (kept in
    # the epilogue; weights stay unscaled so bf16 weight cast loses nothing).
    scale = bn_gamma * jax.lax.rsqrt(bn_var + eps)                 # (C_out,)
    shift = (bias - bn_mean) * scale + bn_beta                     # (C_out,)

    # Weights, tap-major columns: w2[o, k*C_in + i] == weight[o, i, k, 0].
    w = weight[..., 0]                                             # (C_out, C_in, K)
    w2 = jnp.transpose(w, (0, 2, 1)).reshape(C_out, K * C_in).astype(compute_dtype)

    # Channel tiling (pad C_out so every weight/output tile is full).
    if c_out_tile is None:
        c_out_tile = _default_c_out_tile()
    c_out_tile = min(c_out_tile, C_out)
    C_out_pad = pl.cdiv(C_out, c_out_tile) * c_out_tile
    if C_out_pad != C_out:
        pc = C_out_pad - C_out
        w2 = jnp.pad(w2, ((0, pc), (0, 0)))
        scale = jnp.pad(scale, (0, pc))
        shift = jnp.pad(shift, (0, pc))
    scale2 = scale.reshape(C_out_pad, 1).astype(jnp.float32)
    shift2 = shift.reshape(C_out_pad, 1).astype(jnp.float32)

    # Polyphase split of the temporal axis: phase r holds frames r, r+s, ...
    # Tap k of output frame t then reads phase ((k-pad) mod s) at a constant
    # lane shift, so stride > 1 costs no extra MXU work or output DMA.
    T_ph = pl.cdiv(T, stride)
    T_pad = T_ph * stride
    xp = x if T_pad == T else jnp.pad(x, ((0, 0), (0, 0), (0, T_pad - T), (0, 0)))
    TPV = T_ph * V
    x2 = (xp.reshape(N, C_in, T_ph, stride, V)
            .transpose(0, 1, 3, 2, 4)
            .reshape(N, C_in, stride * TPV)
            .astype(compute_dtype))                 # free reshape for stride==1

    # Static lane chunks of the padded output; every width is a multiple of 128.
    chunks = tuple((lo, min(lo + lane_chunk, TV_out_pad))
                   for lo in range(0, TV_out_pad, lane_chunk))

    kernel = functools.partial(_tcn_kernel, K=K, pad=pad, V=V, stride=stride,
                               TPV=TPV, C_in=C_in, chunks=chunks)

    grid = (N, C_out_pad // c_out_tile)

    # VMEM budget from the actual block sizes (inputs/outputs double-buffered).
    cbytes = jnp.dtype(compute_dtype).itemsize
    obytes = jnp.dtype(out_dtype).itemsize
    x_block = C_in * stride * TPV * cbytes
    w_block = c_out_tile * K * C_in * cbytes
    o_block = c_out_tile * TV_out_pad * obytes
    transient = c_out_tile * lane_chunk * 4 + 2 * C_in * lane_chunk * cbytes
    vmem_limit = int(2 * (x_block + w_block + o_block) + transient + (4 << 20))
    vmem_limit = max(16 << 20, min(vmem_limit, 100 << 20))

    flops = 2 * N * C_out_pad * K * C_in * TV_out_pad
    bytes_accessed = (N * C_in * stride * TPV * cbytes
                      + C_out_pad * K * C_in * cbytes
                      + 2 * C_out_pad * 4
                      + N * C_out_pad * TV_out_pad * obytes)

    out = pl.pallas_call(
        kernel,
        out_shape=jax.ShapeDtypeStruct((N, C_out_pad, TV_out_pad), out_dtype),
        grid_spec=pltpu.PrefetchScalarGridSpec(
            num_scalar_prefetch=0,
            grid=grid,
            in_specs=[
                pl.BlockSpec((1, C_in, stride * TPV), lambda n, co: (n, 0, 0)),
                pl.BlockSpec((c_out_tile, K * C_in), lambda n, co: (co, 0)),
                pl.BlockSpec((c_out_tile, 1), lambda n, co: (co, 0)),
                pl.BlockSpec((c_out_tile, 1), lambda n, co: (co, 0)),
            ],
            out_specs=pl.BlockSpec((1, c_out_tile, TV_out_pad),
                                   lambda n, co: (n, co, 0)),
        ),
        compiler_params=pltpu.CompilerParams(
            dimension_semantics=("parallel", "parallel"),
            vmem_limit_bytes=vmem_limit,
        ),
        cost_estimate=pl.CostEstimate(flops=flops, transcendentals=0,
                                      bytes_accessed=bytes_accessed),
    )(x2, w2, scale2, shift2)

    # TODO(synk): for v7x dual-TC load balance at tiny N, promote the lane
    # chunk loop to a third "parallel" grid axis (input block index-invariant
    # in that axis) instead of the in-kernel static loop.
    return out[:, :C_out, :TV_out].reshape(N, C_out, T_out, V)


def _reference_forward(x, weight, bias, bn_gamma, bn_beta, bn_mean, bn_var,
                       *, kernel_size=9, stride=1, eps=1e-5):
    """Pure-JAX reference mirroring PyTorch Conv2d((K,1)) + BatchNorm2d(eval)."""
    pad = (kernel_size - 1) // 2
    y = jax.lax.conv_general_dilated(
        x, weight, window_strides=(stride, 1), padding=((pad, pad), (0, 0)),
        dimension_numbers=("NCHW", "OIHW", "NCHW"),
    )
    y = y + bias[None, :, None, None]
    y = (y - bn_mean[None, :, None, None]) / jnp.sqrt(bn_var + eps)[None, :, None, None]
    return y * bn_gamma[None, :, None, None] + bn_beta[None, :, None, None]


if __name__ == "__main__":
    # Small shapes: N=2 sequences, C_in=4, C_out=8, T=16 frames, V=16 joints.
    N, C_in, C_out, T, V = 2, 4, 8, 16, 16
    K = 9

    key = jax.random.PRNGKey(0)
    kx, kw = jax.random.split(key)
    x = jax.random.normal(kx, (N, C_in, T, V), dtype=jnp.float32)

    # conv_init: kaiming_normal_(mode='fan_out') -> std = sqrt(2/(C_out*K*1)); bias = 0.
    std = math.sqrt(2.0 / (C_out * K * 1))
    weight = jax.random.normal(kw, (C_out, C_in, K, 1), dtype=jnp.float32) * std
    bias = jnp.zeros((C_out,), jnp.float32)

    # bn_init(bn, 1): gamma=1, beta=0; fresh running stats: mean=0, var=1.
    bn_gamma = jnp.ones((C_out,), jnp.float32)
    bn_beta = jnp.zeros((C_out,), jnp.float32)
    bn_mean = jnp.zeros((C_out,), jnp.float32)
    bn_var = jnp.ones((C_out,), jnp.float32)

    # ---- stride=1: strict f32 path ----
    ref1 = _reference_forward(x, weight, bias, bn_gamma, bn_beta, bn_mean, bn_var,
                              kernel_size=K, stride=1)
    out_f32 = unit_tcn_forward(x, weight, bias, bn_gamma, bn_beta, bn_mean, bn_var,
                               kernel_size=K, stride=1,
                               compute_dtype=jnp.float32, out_dtype=jnp.float32)
    out_f32 = jax.block_until_ready(out_f32)
    assert out_f32.shape == (N, C_out, T, V), out_f32.shape
    assert jnp.allclose(out_f32, ref1, atol=1e-4, rtol=1e-4), "f32 stride=1 mismatch"

    # ---- stride=1: fast default path (bf16 in/out, f32 accumulation) ----
    out_bf16 = unit_tcn_forward(x, weight, bias, bn_gamma, bn_beta, bn_mean, bn_var,
                                kernel_size=K, stride=1)
    out_bf16 = jax.block_until_ready(out_bf16)
    assert out_bf16.shape == (N, C_out, T, V), out_bf16.shape
    assert jnp.allclose(out_bf16.astype(jnp.float32), ref1, atol=8e-2, rtol=8e-2), \
        "bf16 stride=1 mismatch"

    # ---- stride=2: in-kernel polyphase strided path, strict f32 ----
    ref2 = _reference_forward(x, weight, bias, bn_gamma, bn_beta, bn_mean, bn_var,
                              kernel_size=K, stride=2)
    out_s2 = unit_tcn_forward(x, weight, bias, bn_gamma, bn_beta, bn_mean, bn_var,
                              kernel_size=K, stride=2,
                              compute_dtype=jnp.float32, out_dtype=jnp.float32)
    out_s2 = jax.block_until_ready(out_s2)
    assert out_s2.shape == ref2.shape, (out_s2.shape, ref2.shape)
    assert jnp.allclose(out_s2, ref2, atol=1e-4, rtol=1e-4), "f32 stride=2 mismatch"

    print("KERNEL_OK")
</pallas_src>

<mosaic_0001>
module attributes {stable_mosaic.version = 11 : i64} {
  func.func @_tcn_kernel(%arg0: i32, %arg1: i32, %arg2: memref<1x4x256xf32, #tpu.memory_space<vmem>>, %arg3: memref<8x36xf32, #tpu.memory_space<vmem>>, %arg4: memref<8x1xf32, #tpu.memory_space<vmem>>, %arg5: memref<8x1xf32, #tpu.memory_space<vmem>>, %arg6: memref<1x8x256xf32, #tpu.memory_space<vmem>>) attributes {dimension_semantics = [#tpu.dimension_semantics<parallel>, #tpu.dimension_semantics<parallel>], iteration_bounds = array<i64: 2, 1>, scalar_prefetch = 0 : i64, scratch_operands = 0 : i64, tpu.core_type = #tpu.core_type<tc>, window_params = [{transform_indices = @transform_0, window_bounds = array<i64: 1, 4, 256>}, {transform_indices = @transform_1, window_bounds = array<i64: 8, 36>}, {transform_indices = @transform_2, window_bounds = array<i64: 8, 1>}, {transform_indices = @transform_3, window_bounds = array<i64: 8, 1>}, {transform_indices = @transform_4, window_bounds = array<i64: 1, 8, 256>}]} {
    %c0 = arith.constant 0 : index
    %c0_0 = arith.constant 0 : index
    %0 = vector.load %arg4[%c0, %c0_0] : memref<8x1xf32, #tpu.memory_space<vmem>>, vector<8x1xf32>
    %c0_1 = arith.constant 0 : index
    %c0_2 = arith.constant 0 : index
    %1 = vector.load %arg5[%c0_1, %c0_2] : memref<8x1xf32, #tpu.memory_space<vmem>>, vector<8x1xf32>
    %cst = arith.constant 0.000000e+00 : f32
    %2 = vector.broadcast %cst : f32 to vector<8x256xf32>
    %c0_3 = arith.constant 0 : index
    %c0_4 = arith.constant 0 : index
    %c0_5 = arith.constant 0 : index
    %3 = vector.load %arg2[%c0_3, %c0_4, %c0_5] : memref<1x4x256xf32, #tpu.memory_space<vmem>>, vector<1x4x192xf32>
    %4 = vector.shape_cast %3 : vector<1x4x192xf32> to vector<4x192xf32>
    %cst_6 = arith.constant 0.000000e+00 : f32
    %5 = vector.broadcast %cst_6 : f32 to vector<4x64xf32>
    %6 = tpu.concatenate %5, %4 in 1 : vector<4x64xf32>, vector<4x192xf32> -> vector<4x256xf32>
    %c0_7 = arith.constant 0 : index
    %c0_8 = arith.constant 0 : index
    %7 = vector.load %arg3[%c0_7, %c0_8] : memref<8x36xf32, #tpu.memory_space<vmem>>, vector<8x4xf32>
    %cst_9 = arith.constant dense<0.000000e+00> : vector<8x256xf32>
    %8 = tpu.matmul %7, %6, %cst_9 {dimension_numbers = #tpu.dot_dimension_numbers<[1], [0], [0], [1], [0, 0, 1, 1], [], []>} : vector<8x4xf32>, vector<4x256xf32>, vector<8x256xf32> -> vector<8x256xf32>
    %9 = arith.addf %2, %8 : vector<8x256xf32>
    %c0_10 = arith.constant 0 : index
    %c0_11 = arith.constant 0 : index
    %c0_12 = arith.constant 0 : index
    %10 = vector.load %arg2[%c0_10, %c0_11, %c0_12] : memref<1x4x256xf32, #tpu.memory_space<vmem>>, vector<1x4x208xf32>
    %11 = vector.shape_cast %10 : vector<1x4x208xf32> to vector<4x208xf32>
    %cst_13 = arith.constant 0.000000e+00 : f32
    %12 = vector.broadcast %cst_13 : f32 to vector<4x48xf32>
    %13 = tpu.concatenate %12, %11 in 1 : vector<4x48xf32>, vector<4x208xf32> -> vector<4x256xf32>
    %c0_14 = arith.constant 0 : index
    %c4 = arith.constant 4 : index
    %14 = vector.load %arg3[%c0_14, %c4] : memref<8x36xf32, #tpu.memory_space<vmem>>, vector<8x4xf32>
    %cst_15 = arith.constant dense<0.000000e+00> : vector<8x256xf32>
    %15 = tpu.matmul %14, %13, %cst_15 {dimension_numbers = #tpu.dot_dimension_numbers<[1], [0], [0], [1], [0, 0, 1, 1], [], []>} : vector<8x4xf32>, vector<4x256xf32>, vector<8x256xf32> -> vector<8x256xf32>
    %16 = arith.addf %9, %15 : vector<8x256xf32>
    %c0_16 = arith.constant 0 : index
    %c0_17 = arith.constant 0 : index
    %c0_18 = arith.constant 0 : index
    %17 = vector.load %arg2[%c0_16, %c0_17, %c0_18] : memref<1x4x256xf32, #tpu.memory_space<vmem>>, vector<1x4x224xf32>
    %18 = vector.shape_cast %17 : vector<1x4x224xf32> to vector<4x224xf32>
    %cst_19 = arith.constant 0.000000e+00 : f32
    %19 = vector.broadcast %cst_19 : f32 to vector<4x32xf32>
    %20 = tpu.concatenate %19, %18 in 1 : vector<4x32xf32>, vector<4x224xf32> -> vector<4x256xf32>
    %c0_20 = arith.constant 0 : index
    %c8 = arith.constant 8 : index
    %21 = vector.load %arg3[%c0_20, %c8] : memref<8x36xf32, #tpu.memory_space<vmem>>, vector<8x4xf32>
    %cst_21 = arith.constant dense<0.000000e+00> : vector<8x256xf32>
    %22 = tpu.matmul %21, %20, %cst_21 {dimension_numbers = #tpu.dot_dimension_numbers<[1], [0], [0], [1], [0, 0, 1, 1], [], []>} : vector<8x4xf32>, vector<4x256xf32>, vector<8x256xf32> -> vector<8x256xf32>
    %23 = arith.addf %16, %22 : vector<8x256xf32>
    %c0_22 = arith.constant 0 : index
    %c0_23 = arith.constant 0 : index
    %c0_24 = arith.constant 0 : index
    %24 = vector.load %arg2[%c0_22, %c0_23, %c0_24] : memref<1x4x256xf32, #tpu.memory_space<vmem>>, vector<1x4x240xf32>
    %25 = vector.shape_cast %24 : vector<1x4x240xf32> to vector<4x240xf32>
    %cst_25 = arith.constant 0.000000e+00 : f32
    %26 = vector.broadcast %cst_25 : f32 to vector<4x16xf32>
    %27 = tpu.concatenate %26, %25 in 1 : vector<4x16xf32>, vector<4x240xf32> -> vector<4x256xf32>
    %c0_26 = arith.constant 0 : index
    %c12 = arith.constant 12 : index
    %28 = vector.load %arg3[%c0_26, %c12] : memref<8x36xf32, #tpu.memory_space<vmem>>, vector<8x4xf32>
    %cst_27 = arith.constant dense<0.000000e+00> : vector<8x256xf32>
    %29 = tpu.matmul %28, %27, %cst_27 {dimension_numbers = #tpu.dot_dimension_numbers<[1], [0], [0], [1], [0, 0, 1, 1], [], []>} : vector<8x4xf32>, vector<4x256xf32>, vector<8x256xf32> -> vector<8x256xf32>
    %30 = arith.addf %23, %29 : vector<8x256xf32>
    %c0_28 = arith.constant 0 : index
    %c0_29 = arith.constant 0 : index
    %c0_30 = arith.constant 0 : index
    %31 = vector.load %arg2[%c0_28, %c0_29, %c0_30] : memref<1x4x256xf32, #tpu.memory_space<vmem>>, vector<1x4x256xf32>
    %32 = vector.shape_cast %31 : vector<1x4x256xf32> to vector<4x256xf32>
    %c0_31 = arith.constant 0 : index
    %c16 = arith.constant 16 : index
    %33 = vector.load %arg3[%c0_31, %c16] : memref<8x36xf32, #tpu.memory_space<vmem>>, vector<8x4xf32>
    %cst_32 = arith.constant dense<0.000000e+00> : vector<8x256xf32>
    %34 = tpu.matmul %33, %32, %cst_32 {dimension_numbers = #tpu.dot_dimension_numbers<[1], [0], [0], [1], [0, 0, 1, 1], [], []>} : vector<8x4xf32>, vector<4x256xf32>, vector<8x256xf32> -> vector<8x256xf32>
    %35 = arith.addf %30, %34 : vector<8x256xf32>
    %c0_33 = arith.constant 0 : index
    %c0_34 = arith.constant 0 : index
    %c16_35 = arith.constant 16 : index
    %36 = vector.load %arg2[%c0_33, %c0_34, %c16_35] : memref<1x4x256xf32, #tpu.memory_space<vmem>>, vector<1x4x240xf32>
    %37 = vector.shape_cast %36 : vector<1x4x240xf32> to vector<4x240xf32>
    %cst_36 = arith.constant 0.000000e+00 : f32
    %38 = vector.broadcast %cst_36 : f32 to vector<4x16xf32>
    %39 = tpu.concatenate %37, %38 in 1 : vector<4x240xf32>, vector<4x16xf32> -> vector<4x256xf32>
    %c0_37 = arith.constant 0 : index
    %c20 = arith.constant 20 : index
    %40 = vector.load %arg3[%c0_37, %c20] : memref<8x36xf32, #tpu.memory_space<vmem>>, vector<8x4xf32>
    %cst_38 = arith.constant dense<0.000000e+00> : vector<8x256xf32>
    %41 = tpu.matmul %40, %39, %cst_38 {dimension_numbers = #tpu.dot_dimension_numbers<[1], [0], [0], [1], [0, 0, 1, 1], [], []>} : vector<8x4xf32>, vector<4x256xf32>, vector<8x256xf32> -> vector<8x256xf32>
    %42 = arith.addf %35, %41 : vector<8x256xf32>
    %c0_39 = arith.constant 0 : index
    %c0_40 = arith.constant 0 : index
    %c32 = arith.constant 32 : index
    %43 = vector.load %arg2[%c0_39, %c0_40, %c32] : memref<1x4x256xf32, #tpu.memory_space<vmem>>, vector<1x4x224xf32>
    %44 = vector.shape_cast %43 : vector<1x4x224xf32> to vector<4x224xf32>
    %cst_41 = arith.constant 0.000000e+00 : f32
    %45 = vector.broadcast %cst_41 : f32 to vector<4x32xf32>
    %46 = tpu.concatenate %44, %45 in 1 : vector<4x224xf32>, vector<4x32xf32> -> vector<4x256xf32>
    %c0_42 = arith.constant 0 : index
    %c24 = arith.constant 24 : index
    %47 = vector.load %arg3[%c0_42, %c24] : memref<8x36xf32, #tpu.memory_space<vmem>>, vector<8x4xf32>
    %cst_43 = arith.constant dense<0.000000e+00> : vector<8x256xf32>
    %48 = tpu.matmul %47, %46, %cst_43 {dimension_numbers = #tpu.dot_dimension_numbers<[1], [0], [0], [1], [0, 0, 1, 1], [], []>} : vector<8x4xf32>, vector<4x256xf32>, vector<8x256xf32> -> vector<8x256xf32>
    %49 = arith.addf %42, %48 : vector<8x256xf32>
    %c0_44 = arith.constant 0 : index
    %c0_45 = arith.constant 0 : index
    %c48 = arith.constant 48 : index
    %50 = vector.load %arg2[%c0_44, %c0_45, %c48] : memref<1x4x256xf32, #tpu.memory_space<vmem>>, vector<1x4x208xf32>
    %51 = vector.shape_cast %50 : vector<1x4x208xf32> to vector<4x208xf32>
    %cst_46 = arith.constant 0.000000e+00 : f32
    %52 = vector.broadcast %cst_46 : f32 to vector<4x48xf32>
    %53 = tpu.concatenate %51, %52 in 1 : vector<4x208xf32>, vector<4x48xf32> -> vector<4x256xf32>
    %c0_47 = arith.constant 0 : index
    %c28 = arith.constant 28 : index
    %54 = vector.load %arg3[%c0_47, %c28] : memref<8x36xf32, #tpu.memory_space<vmem>>, vector<8x4xf32>
    %cst_48 = arith.constant dense<0.000000e+00> : vector<8x256xf32>
    %55 = tpu.matmul %54, %53, %cst_48 {dimension_numbers = #tpu.dot_dimension_numbers<[1], [0], [0], [1], [0, 0, 1, 1], [], []>} : vector<8x4xf32>, vector<4x256xf32>, vector<8x256xf32> -> vector<8x256xf32>
    %56 = arith.addf %49, %55 : vector<8x256xf32>
    %c0_49 = arith.constant 0 : index
    %c0_50 = arith.constant 0 : index
    %c64 = arith.constant 64 : index
    %57 = vector.load %arg2[%c0_49, %c0_50, %c64] : memref<1x4x256xf32, #tpu.memory_space<vmem>>, vector<1x4x192xf32>
    %58 = vector.shape_cast %57 : vector<1x4x192xf32> to vector<4x192xf32>
    %cst_51 = arith.constant 0.000000e+00 : f32
    %59 = vector.broadcast %cst_51 : f32 to vector<4x64xf32>
    %60 = tpu.concatenate %58, %59 in 1 : vector<4x192xf32>, vector<4x64xf32> -> vector<4x256xf32>
    %c0_52 = arith.constant 0 : index
    %c32_53 = arith.constant 32 : index
    %61 = vector.load %arg3[%c0_52, %c32_53] : memref<8x36xf32, #tpu.memory_space<vmem>>, vector<8x4xf32>
    %cst_54 = arith.constant dense<0.000000e+00> : vector<8x256xf32>
    %62 = tpu.matmul %61, %60, %cst_54 {dimension_numbers = #tpu.dot_dimension_numbers<[1], [0], [0], [1], [0, 0, 1, 1], [], []>} : vector<8x4xf32>, vector<4x256xf32>, vector<8x256xf32> -> vector<8x256xf32>
    %63 = arith.addf %56, %62 : vector<8x256xf32>
    %64 = vector.broadcast %0 : vector<8x1xf32> to vector<8x256xf32>
    %65 = arith.mulf %63, %64 : vector<8x256xf32>
    %66 = vector.broadcast %1 : vector<8x1xf32> to vector<8x256xf32>
    %67 = arith.addf %65, %66 : vector<8x256xf32>
    %c0_55 = arith.constant 0 : index
    %c0_56 = arith.constant 0 : index
    %c0_57 = arith.constant 0 : index
    %68 = vector.load %arg6[%c0_55, %c0_56, %c0_57] : memref<1x8x256xf32, #tpu.memory_space<vmem>>, vector<1x8x256xf32>
    %69 = vector.shape_cast %68 : vector<1x8x256xf32> to vector<8x256xf32>
    %70 = vector.shape_cast %67 : vector<8x256xf32> to vector<1x8x256xf32>
    tpu.vector_store %arg6[%c0_55, %c0_56, %c0_57], %70 {strides = array<i32>} : memref<1x8x256xf32, #tpu.memory_space<vmem>>, vector<1x8x256xf32>,
    return
  }
  func.func @transform_0(%arg0: i32, %arg1: i32) -> (i32, i32, i32) {
    %c0_i32 = arith.constant 0 : i32
    %c0_i32_0 = arith.constant 0 : i32
    %c0_i32_1 = arith.constant 0 : i32
    return %arg0, %c0_i32, %c0_i32_0 : i32, i32, i32
  }
  func.func @transform_1(%arg0: i32, %arg1: i32) -> (i32, i32) {
    %c0_i32 = arith.constant 0 : i32
    %c0_i32_0 = arith.constant 0 : i32
    return %arg1, %c0_i32 : i32, i32
  }
  func.func @transform_2(%arg0: i32, %arg1: i32) -> (i32, i32) {
    %c0_i32 = arith.constant 0 : i32
    %c0_i32_0 = arith.constant 0 : i32
    return %arg1, %c0_i32 : i32, i32
  }
  func.func @transform_3(%arg0: i32, %arg1: i32) -> (i32, i32) {
    %c0_i32 = arith.constant 0 : i32
    %c0_i32_0 = arith.constant 0 : i32
    return %arg1, %c0_i32 : i32, i32
  }
  func.func @transform_4(%arg0: i32, %arg1: i32) -> (i32, i32, i32) {
    %c0_i32 = arith.constant 0 : i32
    %c0_i32_0 = arith.constant 0 : i32
    return %arg0, %arg1, %c0_i32 : i32, i32, i32
  }
}

</mosaic_0001>

<llo_original>
// kernel: tpu_custom_call.1
$region0: #{tpu_custom_call.1}
  #allocation0 [shape = 'u32[]', space=smem, size = 0x4, offset = 0x4, fixed_abs, tag = 'smem constant byte address 0x4 - core index']
  #allocation1 [shape = 'u32[144,128]{1,0:T(1,128)}', space=vmem, size = 0x12000, scoped, tag = 'internal scratch']
  %s0 = inlined_call_operand.vmem [shape: f32[2,4,256], index: 0, kind: input, shape index: {}]
  %s1 = inlined_call_operand.hbm [shape: f32[8,36], index: 1, kind: input, shape index: {}]
  %s2 = inlined_call_operand.vmem [shape: f32[8,1], index: 2, kind: input, shape index: {}]
  %s3 = inlined_call_operand.vmem [shape: f32[8,1], index: 3, kind: input, shape index: {}]
  %s4 = inlined_call_operand.hbm [shape: f32[2,8,256], index: 4, kind: output, shape index: {}]
  %s5 = sld [smem:[#allocation0]]
  $region53: #{tpu_custom_call.1} parent=0
    _
  %s7 = ssub.s32 1, %s5
  %s8 = scalar_select 0, %s7, %s5
  $region1: #{tpu_custom_call.1} parent=0
    #allocation2 [shape = 'u8[4096]{0}', space=vmem, size = 0x1000, scoped, tag = 'input window, operand 1, single buffered']
    #allocation3 [shape = 's32[2]{0}', space=sflag, size = 0x8, scoped, tag = 'scoped memory for tpu_custom_call.1']
    #allocation4 [shape = 's32[2]{0}', space=sflag, size = 0x8, scoped, tag = 'scoped memory for tpu_custom_call.1']
    #allocation5 [shape = 'u8[16384]{0}', space=vmem, size = 0x4000, scoped, tag = 'output window, operand 0']
    %9 = vsyncpa [#allocation3], 0
    %10 = vsyncpa [#allocation4], 0
    %s11 = scalar_lea.sflag [#allocation4], 1
    %12 = vsyncpa %s11, 0
    loop: start=0, step=1, limit=4
    $region2: #{tpu_custom_call.1} parent=1 // loop_pre_header
      _
    $region3: #{tpu_custom_call.1} parent=1 // loop_header
      %s14 = sphi 0, %s18
      %p15 = scmp.ge.s32.totalorder %s14, 4
      %s21 = sphi 0, %s33
      %s22 = sphi 0, %s29
      %s23 = sphi 0, %s21
      %s24 = sphi 0, %s22
      %s25 = sphi 0, %s23
      %s26 = sphi 0, %s24
      %s36 = sphi 0, %s38
      %s39 = sphi 0, %s36
      %s40 = sphi 0, %s39
      %s56 = sphi 0, %s40
      %s62 = sphi 0, %s64
      %s65 = sphi 0, %s62
      %s66 = sphi 0, %s65
      %s82 = sphi 0, %s66
      %s88 = sphi 0, %s90
      %s91 = sphi 0, %s88
      %s92 = sphi 0, %s91
      %s108 = sphi 0, %s92
      %s114 = sphi 0, %s116
      %s117 = sphi 0, %s114
      %s118 = sphi 0, %s117
      %s134 = sphi 0, %s118
      %s142 = sphi 0, %s144
      %s145 = sphi 0, %s142
      %s146 = sphi 0, %s145
      %s162 = sphi 0, %s146
    $region4: #{tpu_custom_call.1} parent=1 // loop_header_branch
      %17 = sbr.rel (%p15) target = $region8
    $region5: #{tpu_custom_call.1} parent=1 // loop_body
      %s19 = ssub.s32 %s14, 1
      %s20 = ssub.s32 %s14, 2
      %s27 = sadd.s32 1, %s22
      %p28 = scmp.ge.s32.totalorder %s27, 1
      %s29 = scalar_select %p28, 0, %s27
      %s30 = sadd.s32 1, %s21
      %s31 = scalar_select %p28, %s30, %s21
      %p32 = scmp.ge.s32.totalorder %s31, 2
      %s33 = scalar_select %p32, 0, %s31
      %s34 = ssub.s32 %s21, %s33
      %p35 = scmp.eq.s32.totalorder %s34, 0
      %s37 = sadd.s32 %s36, 1
      %s38 = scalar_select %p35, %s36, %s37
      %p41 = pneg %p35
      %p42 = scmp.eq.s32.totalorder %s14, 1
      %p43 = por %p41, %p42
      %p44 = scmp.ne.s32.totalorder %s36, %s39
      %p45 = scmp.eq.s32.totalorder %s14, 0
      %p46 = por %p44, %p45
      %p47 = scmp.ne.s32.totalorder %s36, %s39
      %p48 = scmp.eq.s32.totalorder %s19, 1
      %p49 = por %p47, %p48
      %p50 = scmp.ne.s32.totalorder %s39, %s40
      %p51 = scmp.eq.s32.totalorder %s19, 0
      %p52 = por %p50, %p51
      %p53 = scmp.ne.s32.totalorder %s39, %s40
      %p54 = scmp.eq.s32.totalorder %s20, 1
      %p55 = por %p53, %p54
      %p57 = scmp.ne.s32.totalorder %s40, %s56
      %p58 = scmp.eq.s32.totalorder %s20, 0
      %p59 = por %p57, %p58
      %s60 = ssub.s32 %s22, %s29
      %p61 = scmp.eq.s32.totalorder %s60, 0
      %s63 = sadd.s32 %s62, 1
      %s64 = scalar_select %p61, %s62, %s63
      %p67 = pneg %p61
      %p68 = scmp.eq.s32.totalorder %s14, 1
      %p69 = por %p67, %p68
      %p70 = scmp.ne.s32.totalorder %s62, %s65
      %p71 = scmp.eq.s32.totalorder %s14, 0
      %p72 = por %p70, %p71
      %p73 = scmp.ne.s32.totalorder %s62, %s65
      %p74 = scmp.eq.s32.totalorder %s19, 1
      %p75 = por %p73, %p74
      %p76 = scmp.ne.s32.totalorder %s65, %s66
      %p77 = scmp.eq.s32.totalorder %s19, 0
      %p78 = por %p76, %p77
      %p79 = scmp.ne.s32.totalorder %s65, %s66
      %p80 = scmp.eq.s32.totalorder %s20, 1
      %p81 = por %p79, %p80
      %p83 = scmp.ne.s32.totalorder %s66, %s82
      %p84 = scmp.eq.s32.totalorder %s20, 0
      %p85 = por %p83, %p84
      %s86 = ssub.s32 %s22, %s29
      %p87 = scmp.eq.s32.totalorder %s86, 0
      %s89 = sadd.s32 %s88, 1
      %s90 = scalar_select %p87, %s88, %s89
      %p93 = pneg %p87
      %p94 = scmp.eq.s32.totalorder %s14, 1
      %p95 = por %p93, %p94
      %p96 = scmp.ne.s32.totalorder %s88, %s91
      %p97 = scmp.eq.s32.totalorder %s14, 0
      %p98 = por %p96, %p97
      %p99 = scmp.ne.s32.totalorder %s88, %s91
      %p100 = scmp.eq.s32.totalorder %s19, 1
      %p101 = por %p99, %p100
      %p102 = scmp.ne.s32.totalorder %s91, %s92
      %p103 = scmp.eq.s32.totalorder %s19, 0
      %p104 = por %p102, %p103
      %p105 = scmp.ne.s32.totalorder %s91, %s92
      %p106 = scmp.eq.s32.totalorder %s20, 1
      %p107 = por %p105, %p106
      %p109 = scmp.ne.s32.totalorder %s92, %s108
      %p110 = scmp.eq.s32.totalorder %s20, 0
      %p111 = por %p109, %p110
      %s112 = ssub.s32 %s22, %s29
      %p113 = scmp.eq.s32.totalorder %s112, 0
      %s115 = sadd.s32 %s114, 1
      %s116 = scalar_select %p113, %s114, %s115
      %p119 = pneg %p113
      %p120 = scmp.eq.s32.totalorder %s14, 1
      %p121 = por %p119, %p120
      %p122 = scmp.ne.s32.totalorder %s114, %s117
      %p123 = scmp.eq.s32.totalorder %s14, 0
      %p124 = por %p122, %p123
      %p125 = scmp.ne.s32.totalorder %s114, %s117
      %p126 = scmp.eq.s32.totalorder %s19, 1
      %p127 = por %p125, %p126
      %p128 = scmp.ne.s32.totalorder %s117, %s118
      %p129 = scmp.eq.s32.totalorder %s19, 0
      %p130 = por %p128, %p129
      %p131 = scmp.ne.s32.totalorder %s117, %s118
      %p132 = scmp.eq.s32.totalorder %s20, 1
      %p133 = por %p131, %p132
      %p135 = scmp.ne.s32.totalorder %s118, %s134
      %p136 = scmp.eq.s32.totalorder %s20, 0
      %p137 = por %p135, %p136
      %s138 = ssub.s32 %s21, %s33
      %s139 = ssub.s32 %s22, %s29
      %s140 = sor.u32 %s138, %s139
      %p141 = scmp.eq.s32.totalorder %s140, 0
      %s143 = sadd.s32 %s142, 1
      %s144 = scalar_select %p141, %s142, %s143
      %p147 = pneg %p141
      %p148 = scmp.eq.s32.totalorder %s14, 1
      %p149 = por %p147, %p148
      %p150 = scmp.ne.s32.totalorder %s142, %s145
      %p151 = scmp.eq.s32.totalorder %s14, 0
      %p152 = por %p150, %p151
      %p153 = scmp.ne.s32.totalorder %s142, %s145
      %p154 = scmp.eq.s32.totalorder %s19, 1
      %p155 = por %p153, %p154
      %p156 = scmp.ne.s32.totalorder %s145, %s146
      %p157 = scmp.eq.s32.totalorder %s19, 0
      %p158 = por %p156, %p157
      %p159 = scmp.ne.s32.totalorder %s145, %s146
      %p160 = scmp.eq.s32.totalorder %s20, 1
      %p161 = por %p159, %p160
      %p163 = scmp.ne.s32.totalorder %s146, %s162
      %p164 = scmp.eq.s32.totalorder %s20, 0
      %p165 = por %p163, %p164
      %p166 = scmp.le.s32.totalorder 1, %s14
      %p167 = scmp.lt.s32.totalorder %s14, 3
      %p168 = pnand %p166, %p167
      %p169 = pneg %p168
      // Predicated region
      $region9: #{tpu_custom_call.1} parent=5 // pred_check
        _
      $region10: #{tpu_custom_call.1} parent=5 // pred_check_branch
        %171 = sbr.rel (%p168) target = $region12
      $region11: #{tpu_custom_call.1} parent=5 // pred_region
        %s172 = ssub.s32 %s14, 1
        // Predicated region
        $region13: #{tpu_custom_call.1} parent=11 // pred_check
          %p173 = pneg %p78
        $region14: #{tpu_custom_call.1} parent=11 // pred_check_branch
          %175 = sbr.rel (%p173) target = $region16
        $region15: #{tpu_custom_call.1} parent=11 // pred_region
          %s177 = ssub.s32 128, 128
          %178 = vsyncadd [#allocation3], %s177
          %s179 = smul.addr %s24, 128
          %s180 = scalar_lea.hbm %s1, %s179
          %s182 = sshll.u32 [#allocation2], 4
          %s183 = int_to_ptr.vmem [resolvable:$true] %s182
          %185 = dma.hbm_to_vmem [thread:$0]  %s180, 128, %s183, [#allocation3]
        $region16: #{tpu_custom_call.1} parent=11 // pred_fallthru
          _
        // Predicated region
        $region17: #{tpu_custom_call.1} parent=11 // pred_check
          %p186 = pneg %p104
        $region18: #{tpu_custom_call.1} parent=11 // pred_check_branch
          %188 = sbr.rel (%p186) target = $region20
        $region19: #{tpu_custom_call.1} parent=11 // pred_region
          %p189 = scmp.lt.s32.totalorder %s24, 0
          %s190 = scalar_select %p189, %s24, 0
          %s191 = smul.addr %s190, 8
          %s192 = scalar_lea.vmem %s2, %s191
        $region20: #{tpu_custom_call.1} parent=11 // pred_fallthru
          _
        // Predicated region
        $region21: #{tpu_custom_call.1} parent=11 // pred_check
          %p193 = pneg %p130
        $region22: #{tpu_custom_call.1} parent=11 // pred_check_branch
          %195 = sbr.rel (%p193) target = $region24
        $region23: #{tpu_custom_call.1} parent=11 // pred_region
          %p196 = scmp.lt.s32.totalorder %s24, 0
          %s197 = scalar_select %p196, %s24, 0
          %s198 = smul.addr %s197, 8
          %s199 = scalar_lea.vmem %s3, %s198
        $region24: #{tpu_custom_call.1} parent=11 // pred_fallthru
          _
      $region12: #{tpu_custom_call.1} parent=5 // pred_fallthru
        _
      %p200 = scmp.lt.s32.totalorder %s14, 2
      // Predicated region
      $region25: #{tpu_custom_call.1} parent=5 // pred_check
        %p201 = pneg %p200
      $region26: #{tpu_custom_call.1} parent=5 // pred_check_branch
        %203 = sbr.rel (%p201) target = $region28
      $region27: #{tpu_custom_call.1} parent=5 // pred_region
        // Predicated region
        $region29: #{tpu_custom_call.1} parent=27 // pred_check
          %p204 = pneg %p46
        $region30: #{tpu_custom_call.1} parent=27 // pred_check_branch
          %206 = sbr.rel (%p204) target = $region32
        $region31: #{tpu_custom_call.1} parent=27 // pred_region
          %p207 = scmp.lt.s32.totalorder %s21, 1
          %s208 = scalar_select %p207, %s21, 1
          %s209 = smul.addr %s208, 2
          %s210 = smul.addr %s209, 4
          %s211 = scalar_lea.vmem %s0, %s210
        $region32: #{tpu_custom_call.1} parent=27 // pred_fallthru
          _
      $region28: #{tpu_custom_call.1} parent=5 // pred_fallthru
        _
      %p212 = scmp.le.s32.totalorder 1, %s14
      %p213 = scmp.lt.s32.totalorder %s14, 3
      %p214 = pnand %p212, %p213
      %p215 = pneg %p214
      // Predicated region
      $region33: #{tpu_custom_call.1} parent=5 // pred_check
        _
      $region34: #{tpu_custom_call.1} parent=5 // pred_check_branch
        %217 = sbr.rel (%p214) target = $region36
      $region35: #{tpu_custom_call.1} parent=5 // pred_region
        %s218 = ssub.s32 %s14, 1
        // Predicated region
        $region37: #{tpu_custom_call.1} parent=35 // pred_check
          %p219 = pneg %p78
        $region38: #{tpu_custom_call.1} parent=35 // pred_check_branch
          %221 = sbr.rel (%p219) target = $region40
        $region39: #{tpu_custom_call.1} parent=35 // pred_region
          %222 = dma.done [#allocation3], 128
        $region40: #{tpu_custom_call.1} parent=35 // pred_fallthru
          _
        %p223 = scmp.lt.s32.totalorder %s23, 1
        %s224 = scalar_select %p223, %s23, 1
        %s225 = smul.addr %s224, 2
        %s226 = smul.addr %s225, 4
        %s227 = scalar_lea.vmem %s0, %s226
        %p228 = pneg %p52
        %p229 = pneg %p49
        %p230 = pneg %p78
        %p231 = pneg %p75
        %p232 = scmp.lt.s32.totalorder %s24, 0
        %s233 = scalar_select %p232, %s24, 0
        %s234 = smul.addr %s233, 8
        %s235 = scalar_lea.vmem %s2, %s234
        %p236 = pneg %p104
        %p237 = pneg %p101
        %p238 = scmp.lt.s32.totalorder %s24, 0
        %s239 = scalar_select %p238, %s24, 0
        %s240 = smul.addr %s239, 8
        %s241 = scalar_lea.vmem %s3, %s240
        %p242 = pneg %p130
        %p243 = pneg %p127
        %p244 = pneg %p158
        %p245 = pneg %p155
        %s246 = sand.u32 %s145, 1
        %s247 = scalar_lea.sflag [#allocation4], %s246
        %s248 = sand.u32 %s145, 1
        %s249 = smul.addr %s248, 16
        %s250 = scalar_lea.vmem [#allocation5], %s249
        %p251 = scmp.lt.s32.totalorder %s23, 1
        %s252 = scalar_select %p251, %s23, 1
        %s253 = smul.addr %s252, 2
        %s254 = smul.addr %s253, 4
        %s255 = scalar_lea.vmem %s0, %s254
        %p256 = scmp.lt.s32.totalorder %s24, 0
        %s257 = scalar_select %p256, %s24, 0
        %s258 = smul.addr %s257, 8
        %s259 = scalar_lea.vmem %s2, %s258
        %p260 = scmp.lt.s32.totalorder %s24, 0
        %s261 = scalar_select %p260, %s24, 0
        %s262 = smul.addr %s261, 8
        %s263 = scalar_lea.vmem %s3, %s262
        %v264 = vld [vmem:[%s259] sm:$0xff]
        %v265 = vld [vmem:[%s263] sm:$0xff]
        %v266 = vld [vmem:[%s255] sm:$0xff]
        %v268 = vcombine.high %v266, %v266
        %269 = vrot.lane.b32.xlu0 %v266, 64
        %v270 = vpop.permute.xlu0 %269
        %271 = vrot.lane.b32.xlu0 %v268, 64
        %v272 = vpop.permute.xlu0 %271
        %vm273 = vcmask 523264
        %v274 = vsel %vm273, %v270, %v272
        %v276 = vsel %vm273, 0.0, %v270
        %v277 = vld [vmem:[#allocation2] sm:$0xff]
        %278 = vrot.lane.b32.xlu0 %v266, 48
        %v279 = vpop.permute.xlu0 %278
        %280 = vrot.lane.b32.xlu0 %v268, 48
        %v281 = vpop.permute.xlu0 %280
        %vm282 = vcmask 392192
        %v283 = vsel %vm282, %v279, %v281
        %v285 = vsel %vm282, 0.0, %v279
        %287 = vrot.lane.b32.xlu0 %v277, 124
        %v288 = vpop.permute.xlu0 %287
        %vm289 = vcmask 31744
        %v290 = vsel %vm289, %v288, 0
        %vm292 = vcmask 1043456
        %v294 = vsel %vm292, %v285, 0
        %v296 = vsel %vm292, %v283, 0
        %298 = vmatprep.subr.mxu0 %v296
        %299 = vmatpush1.msra.mxu0 %v294
        %300 = vmatprep.subr.mxu0 0.0
        %301 = vmatpush1.msra.mxu0 0.0
        %302 = vmatprep.subr.mxu0 0.0
        %303 = vmatpush1.msra.mxu0 0.0
        %304 = vmatprep.subr.mxu0 0.0
        %305 = vmatpush1.msra.mxu0 0.0
        %306 = vmatprep.subr.mxu0 0.0
        %307 = vmatpush1.msra.mxu0 0.0
        %308 = vmatprep.subr.mxu0 0.0
        %309 = vmatpush1.msra.mxu0 0.0
        %310 = vmatprep.subr.mxu0 0.0
        %311 = vmatpush1.msra.mxu0 0.0
        %312 = vmatprep.subr.mxu0 0.0
        %313 = vmatpush1.msra.mxu0 0.0
        %314 = vmatprep.subr.mxu0 0.0
        %315 = vmatpush1.msra.mxu0 0.0
        %316 = vmatprep.subr.mxu0 0.0
        %317 = vmatpush1.msra.mxu0 0.0
        %318 = vmatprep.subr.mxu0 0.0
        %319 = vmatpush1.msra.mxu0 0.0
        %320 = vmatprep.subr.mxu0 0.0
        %321 = vmatpush1.msra.mxu0 0.0
        %322 = vmatprep.subr.mxu0 0.0
        %323 = vmatpush1.msra.mxu0 0.0
        %324 = vmatprep.subr.mxu0 0.0
        %325 = vmatpush1.msra.mxu0 0.0
        %326 = vmatprep.subr.mxu0 0.0
        %327 = vmatpush1.msra.mxu0 0.0
        %328 = vmatprep.subr.mxu0 0.0
        %329 = vmatpush1.msra.mxu0 0.0
        %330 = vmatprep.subr.mxu0 0.0
        %331 = vmatpush1.msra.mxu0 0.0
        %332 = vmatprep.subr.mxu0 0.0
        %333 = vmatpush1.msra.mxu0 0.0
        %334 = vmatprep.subr.mxu0 0.0
        %335 = vmatpush1.msra.mxu0 0.0
        %336 = vmatprep.subr.mxu0 0.0
        %337 = vmatpush1.msra.mxu0 0.0
        %338 = vmatprep.subr.mxu0 0.0
        %339 = vmatpush1.msra.mxu0 0.0
        %340 = vmatprep.subr.mxu0 0.0
        %341 = vmatpush1.msra.mxu0 0.0
        %342 = vmatprep.subr.mxu0 0.0
        %343 = vmatpush1.msra.mxu0 0.0
        %344 = vmatprep.subr.mxu0 0.0
        %345 = vmatpush1.msra.mxu0 0.0
        %346 = vmatprep.subr.mxu0 0.0
        %347 = vmatpush1.msra.mxu0 0.0
        %348 = vmatprep.subr.mxu0 0.0
        %349 = vmatpush1.msra.mxu0 0.0
        %350 = vmatprep.subr.mxu0 0.0
        %351 = vmatpush1.msra.mxu0 0.0
        %352 = vmatprep.subr.mxu0 0.0
        %353 = vmatpush1.msra.mxu0 0.0
        %354 = vmatprep.subr.mxu0 0.0
        %355 = vmatpush1.msra.mxu0 0.0
        %356 = vmatprep.subr.mxu0 0.0
        %357 = vmatpush1.msra.mxu0 0.0
        %358 = vmatprep.subr.mxu0 0.0
        %359 = vmatpush1.msra.mxu0 0.0
        %360 = vmatprep.subr.mxu0 0.0
        %361 = vmatpush1.msra.mxu0 0.0
        %362 = vmatprep.mubr.f32.mxu0 0.0
        %363 = vmatmul.mubr.f32.gmra.mrb[0].mxu0 %v290
        %v364 = vpop.f32.mrb[0].mxu0
        %v365 = vadd.f32 0.0, %v364
        %v366 = vpop.f32.mrb[0].mxu0
        %v367 = vadd.f32 0.0, %v366
        %368 = vdwg.mxu0
        %v369 = vsel %vm289, %v277, 0
        %v372 = vsel %vm292, %v276, 0
        %v374 = vsel %vm292, %v274, 0
        %376 = vmatprep.subr.mxu0 %v374
        %377 = vmatpush1.msra.mxu0 %v372
        %378 = vmatprep.subr.mxu0 0.0
        %379 = vmatpush1.msra.mxu0 0.0
        %380 = vmatprep.subr.mxu0 0.0
        %381 = vmatpush1.msra.mxu0 0.0
        %382 = vmatprep.subr.mxu0 0.0
        %383 = vmatpush1.msra.mxu0 0.0
        %384 = vmatprep.subr.mxu0 0.0
        %385 = vmatpush1.msra.mxu0 0.0
        %386 = vmatprep.subr.mxu0 0.0
        %387 = vmatpush1.msra.mxu0 0.0
        %388 = vmatprep.subr.mxu0 0.0
        %389 = vmatpush1.msra.mxu0 0.0
        %390 = vmatprep.subr.mxu0 0.0
        %391 = vmatpush1.msra.mxu0 0.0
        %392 = vmatprep.subr.mxu0 0.0
        %393 = vmatpush1.msra.mxu0 0.0
        %394 = vmatprep.subr.mxu0 0.0
        %395 = vmatpush1.msra.mxu0 0.0
        %396 = vmatprep.subr.mxu0 0.0
        %397 = vmatpush1.msra.mxu0 0.0
        %398 = vmatprep.subr.mxu0 0.0
        %399 = vmatpush1.msra.mxu0 0.0
        %400 = vmatprep.subr.mxu0 0.0
        %401 = vmatpush1.msra.mxu0 0.0
        %402 = vmatprep.subr.mxu0 0.0
        %403 = vmatpush1.msra.mxu0 0.0
        %404 = vmatprep.subr.mxu0 0.0
        %405 = vmatpush1.msra.mxu0 0.0
        %406 = vmatprep.subr.mxu0 0.0
        %407 = vmatpush1.msra.mxu0 0.0
        %408 = vmatprep.subr.mxu0 0.0
        %409 = vmatpush1.msra.mxu0 0.0
        %410 = vmatprep.subr.mxu0 0.0
        %411 = vmatpush1.msra.mxu0 0.0
        %412 = vmatprep.subr.mxu0 0.0
        %413 = vmatpush1.msra.mxu0 0.0
        %414 = vmatprep.subr.mxu0 0.0
        %415 = vmatpush1.msra.mxu0 0.0
        %416 = vmatprep.subr.mxu0 0.0
        %417 = vmatpush1.msra.mxu0 0.0
        %418 = vmatprep.subr.mxu0 0.0
        %419 = vmatpush1.msra.mxu0 0.0
        %420 = vmatprep.subr.mxu0 0.0
        %421 = vmatpush1.msra.mxu0 0.0
        %422 = vmatprep.subr.mxu0 0.0
        %423 = vmatpush1.msra.mxu0 0.0
        %424 = vmatprep.subr.mxu0 0.0
        %425 = vmatpush1.msra.mxu0 0.0
        %426 = vmatprep.subr.mxu0 0.0
        %427 = vmatpush1.msra.mxu0 0.0
        %428 = vmatprep.subr.mxu0 0.0
        %429 = vmatpush1.msra.mxu0 0.0
        %430 = vmatprep.subr.mxu0 0.0
        %431 = vmatpush1.msra.mxu0 0.0
        %432 = vmatprep.subr.mxu0 0.0
        %433 = vmatpush1.msra.mxu0 0.0
        %434 = vmatprep.subr.mxu0 0.0
        %435 = vmatpush1.msra.mxu0 0.0
        %436 = vmatprep.subr.mxu0 0.0
        %437 = vmatpush1.msra.mxu0 0.0
        %438 = vmatprep.subr.mxu0 0.0
        %439 = vmatpush1.msra.mxu0 0.0
        %440 = vmatprep.mubr.f32.mxu0 0.0
        %441 = vmatmul.mubr.f32.gmra.mrb[0].mxu0 %v369
        %v442 = vpop.f32.mrb[0].mxu0
        %v443 = vadd.f32 %v365, %v442
        %v444 = vpop.f32.mrb[0].mxu0
        %v445 = vadd.f32 %v367, %v444
        %446 = vdwg.mxu0
        %v447 = vld [vmem:[%s255] sm:$0xff]
        %v449 = vcombine.high %v447, %v447
        %450 = vrot.lane.b32.xlu0 %v447, 32
        %v451 = vpop.permute.xlu0 %450
        %452 = vrot.lane.b32.xlu0 %v449, 32
        %v453 = vpop.permute.xlu0 %452
        %vm454 = vcmask 261120
        %v455 = vsel %vm454, %v451, %v453
        %v457 = vsel %vm454, 0.0, %v451
        %v458 = vld [vmem:[#allocation2] sm:$0xff]
        %460 = vrot.lane.b32.xlu0 %v458, 120
        %v461 = vpop.permute.xlu0 %460
        %v462 = vsel %vm289, %v461, 0
        %v465 = vsel %vm292, %v457, 0
        %v467 = vsel %vm292, %v455, 0
        %469 = vmatprep.subr.mxu0 %v467
        %470 = vmatpush1.msra.mxu0 %v465
        %471 = vmatprep.subr.mxu0 0.0
        %472 = vmatpush1.msra.mxu0 0.0
        %473 = vmatprep.subr.mxu0 0.0
        %474 = vmatpush1.msra.mxu0 0.0
        %475 = vmatprep.subr.mxu0 0.0
        %476 = vmatpush1.msra.mxu0 0.0
        %477 = vmatprep.subr.mxu0 0.0
        %478 = vmatpush1.msra.mxu0 0.0
        %479 = vmatprep.subr.mxu0 0.0
        %480 = vmatpush1.msra.mxu0 0.0
        %481 = vmatprep.subr.mxu0 0.0
        %482 = vmatpush1.msra.mxu0 0.0
        %483 = vmatprep.subr.mxu0 0.0
        %484 = vmatpush1.msra.mxu0 0.0
        %485 = vmatprep.subr.mxu0 0.0
        %486 = vmatpush1.msra.mxu0 0.0
        %487 = vmatprep.subr.mxu0 0.0
        %488 = vmatpush1.msra.mxu0 0.0
        %489 = vmatprep.subr.mxu0 0.0
        %490 = vmatpush1.msra.mxu0 0.0
        %491 = vmatprep.subr.mxu0 0.0
        %492 = vmatpush1.msra.mxu0 0.0
        %493 = vmatprep.subr.mxu0 0.0
        %494 = vmatpush1.msra.mxu0 0.0
        %495 = vmatprep.subr.mxu0 0.0
        %496 = vmatpush1.msra.mxu0 0.0
        %497 = vmatprep.subr.mxu0 0.0
        %498 = vmatpush1.msra.mxu0 0.0
        %499 = vmatprep.subr.mxu0 0.0
        %500 = vmatpush1.msra.mxu0 0.0
        %501 = vmatprep.subr.mxu0 0.0
        %502 = vmatpush1.msra.mxu0 0.0
        %503 = vmatprep.subr.mxu0 0.0
        %504 = vmatpush1.msra.mxu0 0.0
        %505 = vmatprep.subr.mxu0 0.0
        %506 = vmatpush1.msra.mxu0 0.0
        %507 = vmatprep.subr.mxu0 0.0
        %508 = vmatpush1.msra.mxu0 0.0
        %509 = vmatprep.subr.mxu0 0.0
        %510 = vmatpush1.msra.mxu0 0.0
        %511 = vmatprep.subr.mxu0 0.0
        %512 = vmatpush1.msra.mxu0 0.0
        %513 = vmatprep.subr.mxu0 0.0
        %514 = vmatpush1.msra.mxu0 0.0
        %515 = vmatprep.subr.mxu0 0.0
        %516 = vmatpush1.msra.mxu0 0.0
        %517 = vmatprep.subr.mxu0 0.0
        %518 = vmatpush1.msra.mxu0 0.0
        %519 = vmatprep.subr.mxu0 0.0
        %520 = vmatpush1.msra.mxu0 0.0
        %521 = vmatprep.subr.mxu0 0.0
        %522 = vmatpush1.msra.mxu0 0.0
        %523 = vmatprep.subr.mxu0 0.0
        %524 = vmatpush1.msra.mxu0 0.0
        %525 = vmatprep.subr.mxu0 0.0
        %526 = vmatpush1.msra.mxu0 0.0
        %527 = vmatprep.subr.mxu0 0.0
        %528 = vmatpush1.msra.mxu0 0.0
        %529 = vmatprep.subr.mxu0 0.0
        %530 = vmatpush1.msra.mxu0 0.0
        %531 = vmatprep.subr.mxu0 0.0
        %532 = vmatpush1.msra.mxu0 0.0
        %533 = vmatprep.mubr.f32.mxu0 0.0
        %534 = vmatmul.mubr.f32.gmra.mrb[0].mxu0 %v462
        %v535 = vpop.f32.mrb[0].mxu0
        %v536 = vadd.f32 0.0, %v535
        %v537 = vpop.f32.mrb[0].mxu0
        %v538 = vadd.f32 0.0, %v537
        %539 = vdwg.mxu0
        %v540 = vadd.f32 %v443, %v536
        %v541 = vadd.f32 %v445, %v538
        %v542 = vld [vmem:[%s255] sm:$0xff]
        %v544 = vcombine.high %v542, %v542
        %545 = vrot.lane.b32.xlu0 %v542, 16
        %v546 = vpop.permute.xlu0 %545
        %547 = vrot.lane.b32.xlu0 %v544, 16
        %v548 = vpop.permute.xlu0 %547
        %vm549 = vcmask 130048
        %v550 = vsel %vm549, %v546, %v548
        %v552 = vsel %vm549, 0.0, %v546
        %v553 = vld [vmem:[#allocation2] sm:$0xff]
        %555 = vrot.lane.b32.xlu0 %v553, 116
        %v556 = vpop.permute.xlu0 %555
        %v557 = vsel %vm289, %v556, 0
        %v560 = vsel %vm292, %v552, 0
        %v562 = vsel %vm292, %v550, 0
        %564 = vmatprep.subr.mxu0 %v562
        %565 = vmatpush1.msra.mxu0 %v560
        %566 = vmatprep.subr.mxu0 0.0
        %567 = vmatpush1.msra.mxu0 0.0
        %568 = vmatprep.subr.mxu0 0.0
        %569 = vmatpush1.msra.mxu0 0.0
        %570 = vmatprep.subr.mxu0 0.0
        %571 = vmatpush1.msra.mxu0 0.0
        %572 = vmatprep.subr.mxu0 0.0
        %573 = vmatpush1.msra.mxu0 0.0
        %574 = vmatprep.subr.mxu0 0.0
        %575 = vmatpush1.msra.mxu0 0.0
        %576 = vmatprep.subr.mxu0 0.0
        %577 = vmatpush1.msra.mxu0 0.0
        %578 = vmatprep.subr.mxu0 0.0
        %579 = vmatpush1.msra.mxu0 0.0
        %580 = vmatprep.subr.mxu0 0.0
        %581 = vmatpush1.msra.mxu0 0.0
        %582 = vmatprep.subr.mxu0 0.0
        %583 = vmatpush1.msra.mxu0 0.0
        %584 = vmatprep.subr.mxu0 0.0
        %585 = vmatpush1.msra.mxu0 0.0
        %586 = vmatprep.subr.mxu0 0.0
        %587 = vmatpush1.msra.mxu0 0.0
        %588 = vmatprep.subr.mxu0 0.0
        %589 = vmatpush1.msra.mxu0 0.0
        %590 = vmatprep.subr.mxu0 0.0
        %591 = vmatpush1.msra.mxu0 0.0
        %592 = vmatprep.subr.mxu0 0.0
        %593 = vmatpush1.msra.mxu0 0.0
        %594 = vmatprep.subr.mxu0 0.0
        %595 = vmatpush1.msra.mxu0 0.0
        %596 = vmatprep.subr.mxu0 0.0
        %597 = vmatpush1.msra.mxu0 0.0
        %598 = vmatprep.subr.mxu0 0.0
        %599 = vmatpush1.msra.mxu0 0.0
        %600 = vmatprep.subr.mxu0 0.0
        %601 = vmatpush1.msra.mxu0 0.0
        %602 = vmatprep.subr.mxu0 0.0
        %603 = vmatpush1.msra.mxu0 0.0
        %604 = vmatprep.subr.mxu0 0.0
        %605 = vmatpush1.msra.mxu0 0.0
        %606 = vmatprep.subr.mxu0 0.0
        %607 = vmatpush1.msra.mxu0 0.0
        %608 = vmatprep.subr.mxu0 0.0
        %609 = vmatpush1.msra.mxu0 0.0
        %610 = vmatprep.subr.mxu0 0.0
        %611 = vmatpush1.msra.mxu0 0.0
        %612 = vmatprep.subr.mxu0 0.0
        %613 = vmatpush1.msra.mxu0 0.0
        %614 = vmatprep.subr.mxu0 0.0
        %615 = vmatpush1.msra.mxu0 0.0
        %616 = vmatprep.subr.mxu0 0.0
        %617 = vmatpush1.msra.mxu0 0.0
        %618 = vmatprep.subr.mxu0 0.0
        %619 = vmatpush1.msra.mxu0 0.0
        %620 = vmatprep.subr.mxu0 0.0
        %621 = vmatpush1.msra.mxu0 0.0
        %622 = vmatprep.subr.mxu0 0.0
        %623 = vmatpush1.msra.mxu0 0.0
        %624 = vmatprep.subr.mxu0 0.0
        %625 = vmatpush1.msra.mxu0 0.0
        %626 = vmatprep.subr.mxu0 0.0
        %627 = vmatpush1.msra.mxu0 0.0
        %628 = vmatprep.mubr.f32.mxu0 0.0
        %629 = vmatmul.mubr.f32.gmra.mrb[0].mxu0 %v557
        %v630 = vpop.f32.mrb[0].mxu0
        %v631 = vadd.f32 0.0, %v630
        %v632 = vpop.f32.mrb[0].mxu0
        %v633 = vadd.f32 0.0, %v632
        %634 = vdwg.mxu0
        %v635 = vadd.f32 %v540, %v631
        %v636 = vadd.f32 %v541, %v633
        %v637 = vld [vmem:[%s255] sm:$0xff]
        %638 = vrot.lane.b32.xlu0 %v553, 112
        %v639 = vpop.permute.xlu0 %638
        %v641 = vcombine.high %v637, %v637
        %v642 = vsel %vm289, %v639, 0
        %v644 = vsel %vm292, %v637, 0
        %v646 = vsel %vm292, %v641, 0
        %648 = vmatprep.subr.mxu0 %v646
        %649 = vmatpush1.msra.mxu0 %v644
        %650 = vmatprep.subr.mxu0 0.0
        %651 = vmatpush1.msra.mxu0 0.0
        %652 = vmatprep.subr.mxu0 0.0
        %653 = vmatpush1.msra.mxu0 0.0
        %654 = vmatprep.subr.mxu0 0.0
        %655 = vmatpush1.msra.mxu0 0.0
        %656 = vmatprep.subr.mxu0 0.0
        %657 = vmatpush1.msra.mxu0 0.0
        %658 = vmatprep.subr.mxu0 0.0
        %659 = vmatpush1.msra.mxu0 0.0
        %660 = vmatprep.subr.mxu0 0.0
        %661 = vmatpush1.msra.mxu0 0.0
        %662 = vmatprep.subr.mxu0 0.0
        %663 = vmatpush1.msra.mxu0 0.0
        %664 = vmatprep.subr.mxu0 0.0
        %665 = vmatpush1.msra.mxu0 0.0
        %666 = vmatprep.subr.mxu0 0.0
        %667 = vmatpush1.msra.mxu0 0.0
        %668 = vmatprep.subr.mxu0 0.0
        %669 = vmatpush1.msra.mxu0 0.0
        %670 = vmatprep.subr.mxu0 0.0
        %671 = vmatpush1.msra.mxu0 0.0
        %672 = vmatprep.subr.mxu0 0.0
        %673 = vmatpush1.msra.mxu0 0.0
        %674 = vmatprep.subr.mxu0 0.0
        %675 = vmatpush1.msra.mxu0 0.0
        %676 = vmatprep.subr.mxu0 0.0
        %677 = vmatpush1.msra.mxu0 0.0
        %678 = vmatprep.subr.mxu0 0.0
        %679 = vmatpush1.msra.mxu0 0.0
        %680 = vmatprep.subr.mxu0 0.0
        %681 = vmatpush1.msra.mxu0 0.0
        %682 = vmatprep.subr.mxu0 0.0
        %683 = vmatpush1.msra.mxu0 0.0
        %684 = vmatprep.subr.mxu0 0.0
        %685 = vmatpush1.msra.mxu0 0.0
        %686 = vmatprep.subr.mxu0 0.0
        %687 = vmatpush1.msra.mxu0 0.0
        %688 = vmatprep.subr.mxu0 0.0
        %689 = vmatpush1.msra.mxu0 0.0
        %690 = vmatprep.subr.mxu0 0.0
        %691 = vmatpush1.msra.mxu0 0.0
        %692 = vmatprep.subr.mxu0 0.0
        %693 = vmatpush1.msra.mxu0 0.0
        %694 = vmatprep.subr.mxu0 0.0
        %695 = vmatpush1.msra.mxu0 0.0
        %696 = vmatprep.subr.mxu0 0.0
        %697 = vmatpush1.msra.mxu0 0.0
        %698 = vmatprep.subr.mxu0 0.0
        %699 = vmatpush1.msra.mxu0 0.0
        %700 = vmatprep.subr.mxu0 0.0
        %701 = vmatpush1.msra.mxu0 0.0
        %702 = vmatprep.subr.mxu0 0.0
        %703 = vmatpush1.msra.mxu0 0.0
        %704 = vmatprep.subr.mxu0 0.0
        %705 = vmatpush1.msra.mxu0 0.0
        %706 = vmatprep.subr.mxu0 0.0
        %707 = vmatpush1.msra.mxu0 0.0
        %708 = vmatprep.subr.mxu0 0.0
        %709 = vmatpush1.msra.mxu0 0.0
        %710 = vmatprep.subr.mxu0 0.0
        %711 = vmatpush1.msra.mxu0 0.0
        %712 = vmatprep.mubr.f32.mxu0 0.0
        %713 = vmatmul.mubr.f32.gmra.mrb[0].mxu0 %v642
        %v714 = vpop.f32.mrb[0].mxu0
        %v715 = vadd.f32 0.0, %v714
        %v716 = vpop.f32.mrb[0].mxu0
        %v717 = vadd.f32 0.0, %v716
        %718 = vdwg.mxu0
        %v719 = vadd.f32 %v635, %v715
        %v720 = vadd.f32 %v636, %v717
        %v721 = vld [vmem:[%s255] sm:$0xff]
        %v723 = vcombine.high %v721, %v721
        %724 = vrot.lane.b32.xlu0 %v721, 112
        %v725 = vpop.permute.xlu0 %724
        %726 = vrot.lane.b32.xlu0 %v723, 112
        %v727 = vpop.permute.xlu0 %726
        %vm728 = vcmask 916480
        %v729 = vsel %vm728, %v725, %v727
        %v731 = vsel %vm728, %v727, 0.0
        %v732 = vld [vmem:[#allocation2] sm:$0xff]
        %734 = vrot.lane.b32.xlu0 %v732, 108
        %v735 = vpop.permute.xlu0 %734
        %v736 = vsel %vm289, %v735, 0
        %v738 = vsel %vm292, %v729, 0
        %v741 = vsel %vm292, %v731, 0
        %743 = vmatprep.subr.mxu0 %v741
        %744 = vmatpush1.msra.mxu0 %v738
        %745 = vmatprep.subr.mxu0 0.0
        %746 = vmatpush1.msra.mxu0 0.0
        %747 = vmatprep.subr.mxu0 0.0
        %748 = vmatpush1.msra.mxu0 0.0
        %749 = vmatprep.subr.mxu0 0.0
        %750 = vmatpush1.msra.mxu0 0.0
        %751 = vmatprep.subr.mxu0 0.0
        %752 = vmatpush1.msra.mxu0 0.0
        %753 = vmatprep.subr.mxu0 0.0
        %754 = vmatpush1.msra.mxu0 0.0
        %755 = vmatprep.subr.mxu0 0.0
        %756 = vmatpush1.msra.mxu0 0.0
        %757 = vmatprep.subr.mxu0 0.0
        %758 = vmatpush1.msra.mxu0 0.0
        %759 = vmatprep.subr.mxu0 0.0
        %760 = vmatpush1.msra.mxu0 0.0
        %761 = vmatprep.subr.mxu0 0.0
        %762 = vmatpush1.msra.mxu0 0.0
        %763 = vmatprep.subr.mxu0 0.0
        %764 = vmatpush1.msra.mxu0 0.0
        %765 = vmatprep.subr.mxu0 0.0
        %766 = vmatpush1.msra.mxu0 0.0
        %767 = vmatprep.subr.mxu0 0.0
        %768 = vmatpush1.msra.mxu0 0.0
        %769 = vmatprep.subr.mxu0 0.0
        %770 = vmatpush1.msra.mxu0 0.0
        %771 = vmatprep.subr.mxu0 0.0
        %772 = vmatpush1.msra.mxu0 0.0
        %773 = vmatprep.subr.mxu0 0.0
        %774 = vmatpush1.msra.mxu0 0.0
        %775 = vmatprep.subr.mxu0 0.0
        %776 = vmatpush1.msra.mxu0 0.0
        %777 = vmatprep.subr.mxu0 0.0
        %778 = vmatpush1.msra.mxu0 0.0
        %779 = vmatprep.subr.mxu0 0.0
        %780 = vmatpush1.msra.mxu0 0.0
        %781 = vmatprep.subr.mxu0 0.0
        %782 = vmatpush1.msra.mxu0 0.0
        %783 = vmatprep.subr.mxu0 0.0
        %784 = vmatpush1.msra.mxu0 0.0
        %785 = vmatprep.subr.mxu0 0.0
        %786 = vmatpush1.msra.mxu0 0.0
        %787 = vmatprep.subr.mxu0 0.0
        %788 = vmatpush1.msra.mxu0 0.0
        %789 = vmatprep.subr.mxu0 0.0
        %790 = vmatpush1.msra.mxu0 0.0
        %791 = vmatprep.subr.mxu0 0.0
        %792 = vmatpush1.msra.mxu0 0.0
        %793 = vmatprep.subr.mxu0 0.0
        %794 = vmatpush1.msra.mxu0 0.0
        %795 = vmatprep.subr.mxu0 0.0
        %796 = vmatpush1.msra.mxu0 0.0
        %797 = vmatprep.subr.mxu0 0.0
        %798 = vmatpush1.msra.mxu0 0.0
        %799 = vmatprep.subr.mxu0 0.0
        %800 = vmatpush1.msra.mxu0 0.0
        %801 = vmatprep.subr.mxu0 0.0
        %802 = vmatpush1.msra.mxu0 0.0
        %803 = vmatprep.subr.mxu0 0.0
        %804 = vmatpush1.msra.mxu0 0.0
        %805 = vmatprep.subr.mxu0 0.0
        %806 = vmatpush1.msra.mxu0 0.0
        %807 = vmatprep.mubr.f32.mxu0 0.0
        %808 = vmatmul.mubr.f32.gmra.mrb[0].mxu0 %v736
        %v809 = vpop.f32.mrb[0].mxu0
        %v810 = vadd.f32 0.0, %v809
        %v811 = vpop.f32.mrb[0].mxu0
        %v812 = vadd.f32 0.0, %v811
        %813 = vdwg.mxu0
        %v814 = vadd.f32 %v719, %v810
        %v815 = vadd.f32 %v720, %v812
        %v816 = vld [vmem:[%s255] sm:$0xff]
        %v818 = vcombine.high %v816, %v816
        %819 = vrot.lane.b32.xlu0 %v816, 96
        %v820 = vpop.permute.xlu0 %819
        %821 = vrot.lane.b32.xlu0 %v818, 96
        %v822 = vpop.permute.xlu0 %821
        %vm823 = vcmask 785408
        %v824 = vsel %vm823, %v820, %v822
        %v826 = vsel %vm823, %v822, 0.0
        %v827 = vld [vmem:[#allocation2] sm:$0xff]
        %829 = vrot.lane.b32.xlu0 %v827, 104
        %v830 = vpop.permute.xlu0 %829
        %v831 = vsel %vm289, %v830, 0
        %v833 = vsel %vm292, %v824, 0
        %v836 = vsel %vm292, %v826, 0
        %838 = vmatprep.subr.mxu0 %v836
        %839 = vmatpush1.msra.mxu0 %v833
        %840 = vmatprep.subr.mxu0 0.0
        %841 = vmatpush1.msra.mxu0 0.0
        %842 = vmatprep.subr.mxu0 0.0
        %843 = vmatpush1.msra.mxu0 0.0
        %844 = vmatprep.subr.mxu0 0.0
        %845 = vmatpush1.msra.mxu0 0.0
        %846 = vmatprep.subr.mxu0 0.0
        %847 = vmatpush1.msra.mxu0 0.0
        %848 = vmatprep.subr.mxu0 0.0
        %849 = vmatpush1.msra.mxu0 0.0
        %850 = vmatprep.subr.mxu0 0.0
        %851 = vmatpush1.msra.mxu0 0.0
        %852 = vmatprep.subr.mxu0 0.0
        %853 = vmatpush1.msra.mxu0 0.0
        %854 = vmatprep.subr.mxu0 0.0
        %855 = vmatpush1.msra.mxu0 0.0
        %856 = vmatprep.subr.mxu0 0.0
        %857 = vmatpush1.msra.mxu0 0.0
        %858 = vmatprep.subr.mxu0 0.0
        %859 = vmatpush1.msra.mxu0 0.0
        %860 = vmatprep.subr.mxu0 0.0
        %861 = vmatpush1.msra.mxu0 0.0
        %862 = vmatprep.subr.mxu0 0.0
        %863 = vmatpush1.msra.mxu0 0.0
        %864 = vmatprep.subr.mxu0 0.0
        %865 = vmatpush1.msra.mxu0 0.0
        %866 = vmatprep.subr.mxu0 0.0
        %867 = vmatpush1.msra.mxu0 0.0
        %868 = vmatprep.subr.mxu0 0.0
        %869 = vmatpush1.msra.mxu0 0.0
        %870 = vmatprep.subr.mxu0 0.0
        %871 = vmatpush1.msra.mxu0 0.0
        %872 = vmatprep.subr.mxu0 0.0
        %873 = vmatpush1.msra.mxu0 0.0
        %874 = vmatprep.subr.mxu0 0.0
        %875 = vmatpush1.msra.mxu0 0.0
        %876 = vmatprep.subr.mxu0 0.0
        %877 = vmatpush1.msra.mxu0 0.0
        %878 = vmatprep.subr.mxu0 0.0
        %879 = vmatpush1.msra.mxu0 0.0
        %880 = vmatprep.subr.mxu0 0.0
        %881 = vmatpush1.msra.mxu0 0.0
        %882 = vmatprep.subr.mxu0 0.0
        %883 = vmatpush1.msra.mxu0 0.0
        %884 = vmatprep.subr.mxu0 0.0
        %885 = vmatpush1.msra.mxu0 0.0
        %886 = vmatprep.subr.mxu0 0.0
        %887 = vmatpush1.msra.mxu0 0.0
        %888 = vmatprep.subr.mxu0 0.0
        %889 = vmatpush1.msra.mxu0 0.0
        %890 = vmatprep.subr.mxu0 0.0
        %891 = vmatpush1.msra.mxu0 0.0
        %892 = vmatprep.subr.mxu0 0.0
        %893 = vmatpush1.msra.mxu0 0.0
        %894 = vmatprep.subr.mxu0 0.0
        %895 = vmatpush1.msra.mxu0 0.0
        %896 = vmatprep.subr.mxu0 0.0
        %897 = vmatpush1.msra.mxu0 0.0
        %898 = vmatprep.subr.mxu0 0.0
        %899 = vmatpush1.msra.mxu0 0.0
        %900 = vmatprep.subr.mxu0 0.0
        %901 = vmatpush1.msra.mxu0 0.0
        %902 = vmatprep.mubr.f32.mxu0 0.0
        %903 = vmatmul.mubr.f32.gmra.mrb[0].mxu0 %v831
        %v904 = vpop.f32.mrb[0].mxu0
        %v905 = vadd.f32 0.0, %v904
        %v906 = vpop.f32.mrb[0].mxu0
        %v907 = vadd.f32 0.0, %v906
        %908 = vdwg.mxu0
        %v909 = vadd.f32 %v814, %v905
        %v910 = vadd.f32 %v815, %v907
        %v911 = vld [vmem:[%s255] sm:$0xff]
        %v913 = vcombine.high %v911, %v911
        %914 = vrot.lane.b32.xlu0 %v911, 80
        %v915 = vpop.permute.xlu0 %914
        %916 = vrot.lane.b32.xlu0 %v913, 80
        %v917 = vpop.permute.xlu0 %916
        %vm918 = vcmask 654336
        %v919 = vsel %vm918, %v915, %v917
        %v921 = vsel %vm918, %v917, 0.0
        %v922 = vld [vmem:[#allocation2] sm:$0xff]
        %924 = vrot.lane.b32.xlu0 %v922, 100
        %v925 = vpop.permute.xlu0 %924
        %v926 = vsel %vm289, %v925, 0
        %v928 = vsel %vm292, %v919, 0
        %v931 = vsel %vm292, %v921, 0
        %933 = vmatprep.subr.mxu0 %v931
        %934 = vmatpush1.msra.mxu0 %v928
        %935 = vmatprep.subr.mxu0 0.0
        %936 = vmatpush1.msra.mxu0 0.0
        %937 = vmatprep.subr.mxu0 0.0
        %938 = vmatpush1.msra.mxu0 0.0
        %939 = vmatprep.subr.mxu0 0.0
        %940 = vmatpush1.msra.mxu0 0.0
        %941 = vmatprep.subr.mxu0 0.0
        %942 = vmatpush1.msra.mxu0 0.0
        %943 = vmatprep.subr.mxu0 0.0
        %944 = vmatpush1.msra.mxu0 0.0
        %945 = vmatprep.subr.mxu0 0.0
        %946 = vmatpush1.msra.mxu0 0.0
        %947 = vmatprep.subr.mxu0 0.0
        %948 = vmatpush1.msra.mxu0 0.0
        %949 = vmatprep.subr.mxu0 0.0
        %950 = vmatpush1.msra.mxu0 0.0
        %951 = vmatprep.subr.mxu0 0.0
        %952 = vmatpush1.msra.mxu0 0.0
        %953 = vmatprep.subr.mxu0 0.0
        %954 = vmatpush1.msra.mxu0 0.0
        %955 = vmatprep.subr.mxu0 0.0
        %956 = vmatpush1.msra.mxu0 0.0
        %957 = vmatprep.subr.mxu0 0.0
        %958 = vmatpush1.msra.mxu0 0.0
        %959 = vmatprep.subr.mxu0 0.0
        %960 = vmatpush1.msra.mxu0 0.0
        %961 = vmatprep.subr.mxu0 0.0
        %962 = vmatpush1.msra.mxu0 0.0
        %963 = vmatprep.subr.mxu0 0.0
        %964 = vmatpush1.msra.mxu0 0.0
        %965 = vmatprep.subr.mxu0 0.0
        %966 = vmatpush1.msra.mxu0 0.0
        %967 = vmatprep.subr.mxu0 0.0
        %968 = vmatpush1.msra.mxu0 0.0
        %969 = vmatprep.subr.mxu0 0.0
        %970 = vmatpush1.msra.mxu0 0.0
        %971 = vmatprep.subr.mxu0 0.0
        %972 = vmatpush1.msra.mxu0 0.0
        %973 = vmatprep.subr.mxu0 0.0
        %974 = vmatpush1.msra.mxu0 0.0
        %975 = vmatprep.subr.mxu0 0.0
        %976 = vmatpush1.msra.mxu0 0.0
        %977 = vmatprep.subr.mxu0 0.0
        %978 = vmatpush1.msra.mxu0 0.0
        %979 = vmatprep.subr.mxu0 0.0
        %980 = vmatpush1.msra.mxu0 0.0
        %981 = vmatprep.subr.mxu0 0.0
        %982 = vmatpush1.msra.mxu0 0.0
        %983 = vmatprep.subr.mxu0 0.0
        %984 = vmatpush1.msra.mxu0 0.0
        %985 = vmatprep.subr.mxu0 0.0
        %986 = vmatpush1.msra.mxu0 0.0
        %987 = vmatprep.subr.mxu0 0.0
        %988 = vmatpush1.msra.mxu0 0.0
        %989 = vmatprep.subr.mxu0 0.0
        %990 = vmatpush1.msra.mxu0 0.0
        %991 = vmatprep.subr.mxu0 0.0
        %992 = vmatpush1.msra.mxu0 0.0
        %993 = vmatprep.subr.mxu0 0.0
        %994 = vmatpush1.msra.mxu0 0.0
        %995 = vmatprep.subr.mxu0 0.0
        %996 = vmatpush1.msra.mxu0 0.0
        %997 = vmatprep.mubr.f32.mxu0 0.0
        %998 = vmatmul.mubr.f32.gmra.mrb[0].mxu0 %v926
        %v999 = vpop.f32.mrb[0].mxu0
        %v1000 = vadd.f32 0.0, %v999
        %v1001 = vpop.f32.mrb[0].mxu0
        %v1002 = vadd.f32 0.0, %v1001
        %1003 = vdwg.mxu0
        %v1004 = vadd.f32 %v909, %v1000
        %v1005 = vadd.f32 %v910, %v1002
        %v1006 = vld [vmem:[%s255] sm:$0xff]
        %v1008 = vcombine.high %v1006, %v1006
        %1009 = vrot.lane.b32.xlu0 %v1006, 64
        %v1010 = vpop.permute.xlu0 %1009
        %1011 = vrot.lane.b32.xlu0 %v1008, 64
        %v1012 = vpop.permute.xlu0 %1011
        %v1013 = vsel %vm273, %v1010, %v1012
        %v1015 = vsel %vm273, %v1012, 0.0
        %v1016 = vld [vmem:[#allocation2] sm:$0xff]
        %1018 = vrot.lane.b32.xlu0 %v1016, 96
        %v1019 = vpop.permute.xlu0 %1018
        %v1020 = vsel %vm289, %v1019, 0
        %v1022 = vsel %vm292, %v1013, 0
        %v1025 = vsel %vm292, %v1015, 0
        %1027 = vmatprep.subr.mxu0 %v1025
        %1028 = vmatpush1.msra.mxu0 %v1022
        %1029 = vmatprep.subr.mxu0 0.0
        %1030 = vmatpush1.msra.mxu0 0.0
        %1031 = vmatprep.subr.mxu0 0.0
        %1032 = vmatpush1.msra.mxu0 0.0
        %1033 = vmatprep.subr.mxu0 0.0
        %1034 = vmatpush1.msra.mxu0 0.0
        %1035 = vmatprep.subr.mxu0 0.0
        %1036 = vmatpush1.msra.mxu0 0.0
        %1037 = vmatprep.subr.mxu0 0.0
        %1038 = vmatpush1.msra.mxu0 0.0
        %1039 = vmatprep.subr.mxu0 0.0
        %1040 = vmatpush1.msra.mxu0 0.0
        %1041 = vmatprep.subr.mxu0 0.0
        %1042 = vmatpush1.msra.mxu0 0.0
        %1043 = vmatprep.subr.mxu0 0.0
        %1044 = vmatpush1.msra.mxu0 0.0
        %1045 = vmatprep.subr.mxu0 0.0
        %1046 = vmatpush1.msra.mxu0 0.0
        %1047 = vmatprep.subr.mxu0 0.0
        %1048 = vmatpush1.msra.mxu0 0.0
        %1049 = vmatprep.subr.mxu0 0.0
        %1050 = vmatpush1.msra.mxu0 0.0
        %1051 = vmatprep.subr.mxu0 0.0
        %1052 = vmatpush1.msra.mxu0 0.0
        %1053 = vmatprep.subr.mxu0 0.0
        %1054 = vmatpush1.msra.mxu0 0.0
        %1055 = vmatprep.subr.mxu0 0.0
        %1056 = vmatpush1.msra.mxu0 0.0
        %1057 = vmatprep.subr.mxu0 0.0
        %1058 = vmatpush1.msra.mxu0 0.0
        %1059 = vmatprep.subr.mxu0 0.0
        %1060 = vmatpush1.msra.mxu0 0.0
        %1061 = vmatprep.subr.mxu0 0.0
        %1062 = vmatpush1.msra.mxu0 0.0
        %1063 = vmatprep.subr.mxu0 0.0
        %1064 = vmatpush1.msra.mxu0 0.0
        %1065 = vmatprep.subr.mxu0 0.0
        %1066 = vmatpush1.msra.mxu0 0.0
        %1067 = vmatprep.subr.mxu0 0.0
        %1068 = vmatpush1.msra.mxu0 0.0
        %1069 = vmatprep.subr.mxu0 0.0
        %1070 = vmatpush1.msra.mxu0 0.0
        %1071 = vmatprep.subr.mxu0 0.0
        %1072 = vmatpush1.msra.mxu0 0.0
        %1073 = vmatprep.subr.mxu0 0.0
        %1074 = vmatpush1.msra.mxu0 0.0
        %1075 = vmatprep.subr.mxu0 0.0
        %1076 = vmatpush1.msra.mxu0 0.0
        %1077 = vmatprep.subr.mxu0 0.0
        %1078 = vmatpush1.msra.mxu0 0.0
        %1079 = vmatprep.subr.mxu0 0.0
        %1080 = vmatpush1.msra.mxu0 0.0
        %1081 = vmatprep.subr.mxu0 0.0
        %1082 = vmatpush1.msra.mxu0 0.0
        %1083 = vmatprep.subr.mxu0 0.0
        %1084 = vmatpush1.msra.mxu0 0.0
        %1085 = vmatprep.subr.mxu0 0.0
        %1086 = vmatpush1.msra.mxu0 0.0
        %1087 = vmatprep.subr.mxu0 0.0
        %1088 = vmatpush1.msra.mxu0 0.0
        %1089 = vmatprep.subr.mxu0 0.0
        %1090 = vmatpush1.msra.mxu0 0.0
        %1091 = vmatprep.mubr.f32.mxu0 0.0
        %1092 = vmatmul.mubr.f32.gmra.mrb[0].mxu0 %v1020
        %v1093 = vpop.f32.mrb[0].mxu0
        %v1094 = vadd.f32 0.0, %v1093
        %v1095 = vpop.f32.mrb[0].mxu0
        %v1096 = vadd.f32 0.0, %v1095
        %1097 = vdwg.mxu0
        %v1098 = vadd.f32 %v1004, %v1094
        %v1099 = vadd.f32 %v1005, %v1096
        %1101 = vset.pattern.permute.xlu0 0
        %1102 = vperm.xlu0 %1101, %v264
        %v1103 = vpop.permute.xlu0 %1102
        %v1105 = vmul.f32 %v1098, %v1103
        %v1106 = vmul.f32 %v1099, %v1103
        %1108 = vset.pattern.permute.xlu0 0
        %1109 = vperm.xlu0 %1108, %v265
        %v1110 = vpop.permute.xlu0 %1109
        %v1112 = vadd.f32 %v1105, %v1110
        %v1113 = vadd.f32 %v1106, %v1110
        %1114 = vst [vmem:[%s250] sm:$0xff] %v1112
        %1115 = vst [vmem:[%s250 + $0x8] sm:$0xff] %v1113
        %s1116 = sand.u32 %s145, 1
        %s1117 = scalar_lea.sflag [#allocation4], %s1116
        %s1118 = sand.u32 %s145, 1
        %s1119 = smul.addr %s1118, 16
        %s1120 = scalar_lea.vmem [#allocation5], %s1119
        // Predicated region
        $region41: #{tpu_custom_call.1} parent=35 // pred_check
          %p1121 = pneg %p155
        $region42: #{tpu_custom_call.1} parent=35 // pred_check_branch
          %1123 = sbr.rel (%p1121) target = $region44
        $region43: #{tpu_custom_call.1} parent=35 // pred_region
          %s1125 = ssub.s32 256, 256
          %1126 = vsyncadd %s1117, %s1125
          %s1127 = smul.addr %s24, 2
          %s1128 = smul.addr %s23, 2
          %s1129 = sadd.s32 %s1127, %s1128
          %s1130 = smul.addr %s1129, 128
          %s1131 = scalar_lea.hbm %s4, %s1130
          %s1133 = sshll.u32 %s1120, 4
          %s1134 = int_to_ptr.vmem [resolvable:$true] %s1133
          %1136 = dma.vmem_to_hbm [thread:$0]  %s1134, 256, %s1131, %s1117
        $region44: #{tpu_custom_call.1} parent=35 // pred_fallthru
          _
      $region36: #{tpu_custom_call.1} parent=5 // pred_fallthru
        _
      %p1137 = scmp.le.s32.totalorder 2, %s14
      // Predicated region
      $region45: #{tpu_custom_call.1} parent=5 // pred_check
        %p1138 = pneg %p1137
      $region46: #{tpu_custom_call.1} parent=5 // pred_check_branch
        %1140 = sbr.rel (%p1138) target = $region48
      $region47: #{tpu_custom_call.1} parent=5 // pred_region
        %s1141 = ssub.s32 %s14, 2
        // Predicated region
        $region49: #{tpu_custom_call.1} parent=47 // pred_check
          %p1142 = pneg %p161
        $region50: #{tpu_custom_call.1} parent=47 // pred_check_branch
          %1144 = sbr.rel (%p1142) target = $region52
        $region51: #{tpu_custom_call.1} parent=47 // pred_region
          %s1145 = sand.u32 %s146, 1
          %s1146 = scalar_lea.sflag [#allocation4], %s1145
          %s1147 = sand.u32 %s146, 1
          %s1148 = smul.addr %s1147, 16
          %s1149 = scalar_lea.vmem [#allocation5], %s1148
          %1150 = dma.done %s1146, 256
        $region52: #{tpu_custom_call.1} parent=47 // pred_fallthru
          _
      $region48: #{tpu_custom_call.1} parent=5 // pred_fallthru
        _
    $region6: #{tpu_custom_call.1} parent=1 // loop_footer
      %s18 = sadd.s32 1, %s14
    $region7: #{tpu_custom_call.1} parent=1 // loop_footer_branch
      %13 = sbr.rel target = $region3
    $region8: #{tpu_custom_call.1} parent=1 // loop_exit
      _
    %1151 = vsyncpa [#allocation3], 1
    %s1152 = scalar_lea.sflag [#allocation3], 1
    %1153 = vsyncpa %s1152, 1
    %1154 = vsyncpa [#allocation4], 1
    %s1155 = scalar_lea.sflag [#allocation4], 1
    %1156 = vsyncpa %s1155, 1

</llo_original>
